<compile_context>
chip_gen: v6e
topology: v6e:2x2x1
jax: 0.10.0
libtpu: 0.0.40
codegen_flags: <defaults>
</compile_context>

<pallas_src>
import functools
import math

import jax
import jax.numpy as jnp
from jax.experimental import pallas as pl
from jax.experimental.pallas import tpu as pltpu


# ---------------------------------------------------------------------------
# kernels
# ---------------------------------------------------------------------------

def _sdpa_scores_kernel(*refs, has_bias: bool, scale: float):
    """Full-row softmax path: emits normalized probabilities + output."""
    if has_bias:
        bias_ref, q_ref, k_ref, v_ref, out_ref, scores_ref = refs
    else:
        q_ref, k_ref, v_ref, out_ref, scores_ref = refs

    q = q_ref[...]                       # (G, tq, d_k)  native dtype
    kb = k_ref[...]                      # (G, Lk, d_k)  resident across q tiles
    vb = v_ref[...]                      # (G, Lk, d_v)

    # q / sqrt(d_k) in native dtype (weak-typed python float -> no upcast).
    s = jnp.einsum("gqd,gkd->gqk", q * scale, kb,
                   preferred_element_type=jnp.float32)
    if has_bias:
        s = s + bias_ref[...].astype(jnp.float32)[None, :, :]

    m = jnp.max(s, axis=-1, keepdims=True)
    e = jnp.exp(s - m)
    l = jnp.sum(e, axis=-1, keepdims=True)
    inv = 1.0 / l                        # exact; (G, tq, 1) only -> ~free

    # Write the normalized probabilities once and reuse the stored block as
    # the PV-matmul LHS (saves one full-size (G,tq,Lk) f32 temp + cast pass).
    scores_ref[...] = (e * inv).astype(scores_ref.dtype)
    p = scores_ref[...]
    out = jnp.einsum("gqk,gkd->gqd", p, vb, preferred_element_type=jnp.float32)
    out_ref[...] = out.astype(out_ref.dtype)


def _sdpa_flash_kernel(*refs, has_bias: bool, scale: float):
    """Online-softmax (flash) path: output only, no probability writeback."""
    if has_bias:
        bias_ref, q_ref, k_ref, v_ref, out_ref, m_ref, l_ref, acc_ref = refs
    else:
        q_ref, k_ref, v_ref, out_ref, m_ref, l_ref, acc_ref = refs

    kk = pl.program_id(2)

    @pl.when(kk == 0)
    def _():
        m_ref[...] = jnp.full_like(m_ref, -jnp.inf)
        l_ref[...] = jnp.zeros_like(l_ref)
        acc_ref[...] = jnp.zeros_like(acc_ref)

    q = q_ref[...]                       # (G, tq, d_k)
    kb = k_ref[...]                      # (G, tk, d_k)
    vb = v_ref[...]                      # (G, tk, d_v)

    s = jnp.einsum("gqd,gkd->gqk", q * scale, kb,
                   preferred_element_type=jnp.float32)
    if has_bias:
        s = s + bias_ref[...].astype(jnp.float32)[None, :, :]

    m_prev = m_ref[...]
    m_new = jnp.maximum(m_prev, jnp.max(s, axis=-1, keepdims=True))
    alpha = jnp.exp(m_prev - m_new)
    p = jnp.exp(s - m_new)
    l_ref[...] = alpha * l_ref[...] + jnp.sum(p, axis=-1, keepdims=True)
    acc_ref[...] = alpha * acc_ref[...] + jnp.einsum(
        "gqk,gkd->gqd", p.astype(vb.dtype), vb,
        preferred_element_type=jnp.float32)
    m_ref[...] = m_new

    @pl.when(kk == pl.num_programs(2) - 1)
    def _():
        out_ref[...] = (acc_ref[...] / l_ref[...]).astype(out_ref.dtype)


# ---------------------------------------------------------------------------
# VMEM budget / tiling heuristics
# ---------------------------------------------------------------------------

def _vmem_capacity_bytes() -> int:
    try:
        info = pltpu.get_tpu_info()
        cap = int(getattr(info, "vmem_capacity_bytes", 0))
        if cap > 0:
            return cap
    except Exception:
        pass
    return 64 * 1024 * 1024   # conservative fallback (v7x per-core size)


def _pad_up(n: int, m: int) -> int:
    return ((n + m - 1) // m) * m


def _tile_bytes(shape, itemsize: int) -> int:
    """VMEM bytes of ONE buffer with (sublane, lane) padding applied."""
    shape = tuple(int(d) for d in shape)
    if not shape:
        return itemsize
    lane = _pad_up(shape[-1], 128)
    if len(shape) == 1:
        return lane * itemsize
    sub = _pad_up(shape[-2], max(1, 32 // itemsize))   # 8 f32 / 16 bf16 sublanes
    lead = 1
    for d in shape[:-2]:
        lead *= d
    return lead * sub * lane * itemsize


def _divisors_desc(n: int):
    return sorted((d for d in range(1, n + 1) if n % d == 0), reverse=True)


def _q_tile_candidates(Lq: int, cap: int = 512):
    cands = [d for d in _divisors_desc(Lq) if d <= cap and d % 8 == 0]
    return cands or [Lq]


def _k_tile_candidates(Lk: int, has_bias: bool, cap: int = 512):
    # with a bias block the key tile becomes its lane (last) dim -> keep it
    # a multiple of 128 (or the full row).
    mult = 128 if has_bias else 8
    cands = [d for d in _divisors_desc(Lk) if d <= cap and d % mult == 0]
    return cands or [Lk]


def _scores_vmem_bytes(G, tq, Lk, d_k, d_v, in_item, score_item, has_bias):
    total = 0
    total += 2 * _tile_bytes((G, tq, d_k), in_item)       # q   (double-buffered)
    # TODO(synk): single-buffer K/V (pl.Buffered(1)) — their block index is
    # constant across the q-tile axis; budget counts them double-buffered.
    total += 2 * _tile_bytes((G, Lk, d_k), in_item)       # k
    total += 2 * _tile_bytes((G, Lk, d_v), in_item)       # v
    total += 2 * _tile_bytes((G, tq, d_v), in_item)       # out
    total += 2 * _tile_bytes((G, tq, Lk), score_item)     # scores
    if has_bias:
        total += 2 * _tile_bytes((tq, Lk), in_item)
    # live f32 body temporaries (s, e, normalized block) + PV accumulator
    total += 3 * _tile_bytes((G, tq, Lk), 4)
    total += _tile_bytes((G, tq, d_v), 4)
    return total


def _flash_vmem_bytes(G, tq, tk, d_k, d_v, in_item, has_bias):
    total = 0
    total += 2 * _tile_bytes((G, tq, d_k), in_item)
    total += 2 * _tile_bytes((G, tk, d_k), in_item)
    total += 2 * _tile_bytes((G, tk, d_v), in_item)
    total += 2 * _tile_bytes((G, tq, d_v), in_item)
    if has_bias:
        total += 2 * _tile_bytes((tq, tk), in_item)
    # persistent scratch (m, l, acc) + live f32 temporaries (s, p, update)
    total += 2 * _tile_bytes((G, tq, 1), 4)
    total += _tile_bytes((G, tq, d_v), 4)
    total += 3 * _tile_bytes((G, tq, tk), 4)
    total += _tile_bytes((G, tq, d_v), 4)
    return total


def _choose_scores_tiling(BH, Lq, Lk, d_k, d_v, in_item, score_item, has_bias,
                          budget):
    best = None                                           # (work, G, tq)
    for tq in _q_tile_candidates(Lq):
        for G in _divisors_desc(BH):
            if _scores_vmem_bytes(G, tq, Lk, d_k, d_v, in_item, score_item,
                                  has_bias) <= budget:
                work = G * tq
                if best is None or work > best[0]:
                    best = (work, G, tq)
                break                                     # largest fitting G
    if best is None:                                      # row must stay whole
        return 1, min(_q_tile_candidates(Lq))
    return best[1], best[2]


def _choose_flash_tiling(BH, Lq, Lk, d_k, d_v, in_item, has_bias, budget):
    best = None                                           # (work, G, tq, tk)
    for tq in _q_tile_candidates(Lq):
        for tk in _k_tile_candidates(Lk, has_bias):
            for G in _divisors_desc(BH):
                if _flash_vmem_bytes(G, tq, tk, d_k, d_v, in_item,
                                     has_bias) <= budget:
                    work = G * tq * tk
                    if best is None or work > best[0]:
                        best = (work, G, tq, tk)
                    break
    if best is None:
        return 1, min(_q_tile_candidates(Lq)), min(_k_tile_candidates(Lk, has_bias))
    return best[1], best[2], best[3]


# ---------------------------------------------------------------------------
# wrapper
# ---------------------------------------------------------------------------

def scaled_dot_product_attention(q, k, v, mask=None, *, return_scores=True):
    """q: (B,H,Lq,d_k), k: (B,H,Lk,d_k), v: (B,H,Lk,d_v), mask: (Lq,Lk) or None.

    Returns (output, scores) like the PyTorch module; scores is None when
    return_scores=False (flash fast path, no probability writeback).
    """
    B, H, Lq, d_k = q.shape
    Lk = k.shape[2]
    d_v = v.shape[-1]
    BH = B * H

    qf = q.reshape(BH, Lq, d_k)
    kf = k.reshape(BH, Lk, d_k)
    vf = v.reshape(BH, Lk, d_v)

    has_bias = mask is not None
    scale = 1.0 / math.sqrt(d_k)
    in_item = q.dtype.itemsize

    cap = _vmem_capacity_bytes()
    budget = int(cap * 0.70)
    vmem_limit = int(cap * 0.80)

    bias = None
    if has_bias:
        # additive bias: 0 where kept, -1e9 where masked.  mask is (Lq, Lk),
        # shared across batch and heads (matches mask.unsqueeze(0).unsqueeze(0)).
        # TODO(synk): synthesize structured (e.g. causal) masks in-kernel from
        # broadcasted_iota instead of DMA-ing a bias block every grid step.
        bias = jnp.where(mask == 0, jnp.float32(-1e9),
                         jnp.float32(0.0)).astype(q.dtype)

    if return_scores:
        # ------- full-row softmax path (probabilities required) -------------
        G, tq = _choose_scores_tiling(BH, Lq, Lk, d_k, d_v, in_item, in_item,
                                      has_bias, budget)
        grid = (BH // G, Lq // tq)

        inputs, in_specs = [], []
        if has_bias:
            in_specs.append(pl.BlockSpec((tq, Lk), lambda b, i: (i, 0)))
            inputs.append(bias)
        in_specs += [
            pl.BlockSpec((G, tq, d_k), lambda b, i: (b, i, 0)),   # q
            pl.BlockSpec((G, Lk, d_k), lambda b, i: (b, 0, 0)),   # k (resident)
            pl.BlockSpec((G, Lk, d_v), lambda b, i: (b, 0, 0)),   # v (resident)
        ]
        inputs += [qf, kf, vf]

        out_shape = (jax.ShapeDtypeStruct((BH, Lq, d_v), q.dtype),
                     jax.ShapeDtypeStruct((BH, Lq, Lk), q.dtype))
        out_specs = (pl.BlockSpec((G, tq, d_v), lambda b, i: (b, i, 0)),
                     pl.BlockSpec((G, tq, Lk), lambda b, i: (b, i, 0)))

        kernel = functools.partial(_sdpa_scores_kernel,
                                   has_bias=has_bias, scale=scale)
        out, scores = pl.pallas_call(
            kernel,
            out_shape=out_shape,
            grid=grid,
            in_specs=in_specs,
            out_specs=out_specs,
            compiler_params=pltpu.CompilerParams(
                # q-tile axis kept "arbitrary": a megacore split of it would
                # force both TCs to re-DMA the same resident K/V blocks.
                dimension_semantics=("parallel", "arbitrary"),
                vmem_limit_bytes=vmem_limit),
        )(*inputs)
        return out.reshape(B, H, Lq, d_v), scores.reshape(B, H, Lq, Lk)

    # ------- flash / online-softmax path (no probabilities) -----------------
    G, tq, tk = _choose_flash_tiling(BH, Lq, Lk, d_k, d_v, in_item,
                                     has_bias, budget)
    grid = (BH // G, Lq // tq, Lk // tk)

    inputs, in_specs = [], []
    if has_bias:
        in_specs.append(pl.BlockSpec((tq, tk), lambda b, i, kk: (i, kk)))
        inputs.append(bias)
    in_specs += [
        pl.BlockSpec((G, tq, d_k), lambda b, i, kk: (b, i, 0)),   # q
        pl.BlockSpec((G, tk, d_k), lambda b, i, kk: (b, kk, 0)),  # k tile
        pl.BlockSpec((G, tk, d_v), lambda b, i, kk: (b, kk, 0)),  # v tile
    ]
    inputs += [qf, kf, vf]

    out_shape = jax.ShapeDtypeStruct((BH, Lq, d_v), q.dtype)
    out_specs = pl.BlockSpec((G, tq, d_v), lambda b, i, kk: (b, i, 0))

    kernel = functools.partial(_sdpa_flash_kernel,
                               has_bias=has_bias, scale=scale)
    out = pl.pallas_call(
        kernel,
        out_shape=out_shape,
        grid=grid,
        in_specs=in_specs,
        out_specs=out_specs,
        scratch_shapes=[pltpu.VMEM((G, tq, 1), jnp.float32),    # running max
                        pltpu.VMEM((G, tq, 1), jnp.float32),    # running sum
                        pltpu.VMEM((G, tq, d_v), jnp.float32)], # accumulator
        compiler_params=pltpu.CompilerParams(
            dimension_semantics=("parallel", "parallel", "arbitrary"),
            vmem_limit_bytes=vmem_limit),
    )(*inputs)
    return out.reshape(B, H, Lq, d_v), None


# ---------------------------------------------------------------------------
# demo / self-test
# ---------------------------------------------------------------------------

if __name__ == "__main__":
    B, H, L, D_K, D_V = 2, 2, 8, 32, 32
    key = jax.random.PRNGKey(0)
    kq, kk_, kv = jax.random.split(key, 3)

    q = jax.random.normal(kq, (B, H, L, D_K), dtype=jnp.float32)
    k = jax.random.normal(kk_, (B, H, L, D_K), dtype=jnp.float32)
    v = jax.random.normal(kv, (B, H, L, D_V), dtype=jnp.float32)

    # causal mask (Lq, Lk): 1 = keep, 0 = mask out
    mask = jnp.tril(jnp.ones((L, L), dtype=jnp.int32))

    # pure-JAX reference (exact masked_fill semantics, f32 throughout)
    def ref(q, k, v, mask):
        s = jnp.einsum("bhqd,bhkd->bhqk", q / (D_K ** 0.5), k)
        if mask is not None:
            s = jnp.where(mask[None, None] == 0, -1000000000.0, s)
        p = jax.nn.softmax(s, axis=-1)
        return jnp.einsum("bhqk,bhkd->bhqd", p, v), p

    # --- f32, masked, with scores --------------------------------------------
    out_m, scores_m = scaled_dot_product_attention(q, k, v, mask)
    # --- f32, no mask ---------------------------------------------------------
    out_n, scores_n = scaled_dot_product_attention(q, k, v, None)
    # --- flash fast path (no scores), masked and unmasked ---------------------
    out_f, scores_f = scaled_dot_product_attention(q, k, v, mask,
                                                   return_scores=False)
    out_fn, _ = scaled_dot_product_attention(q, k, v, None,
                                             return_scores=False)
    # --- bf16 path: MXU-native inputs, f32 accumulation -----------------------
    out_b, scores_b = scaled_dot_product_attention(
        q.astype(jnp.bfloat16), k.astype(jnp.bfloat16),
        v.astype(jnp.bfloat16), mask)
    jax.block_until_ready((out_m, scores_m, out_n, scores_n,
                           out_f, out_fn, out_b, scores_b))

    ro_m, rp_m = ref(q, k, v, mask)
    ro_n, rp_n = ref(q, k, v, None)

    TOL = 2e-2
    assert jnp.allclose(out_m, ro_m, atol=TOL), "output mismatch (masked)"
    assert jnp.allclose(scores_m, rp_m, atol=TOL), "scores mismatch (masked)"
    assert jnp.allclose(out_n, ro_n, atol=TOL), "output mismatch (unmasked)"
    assert jnp.allclose(scores_n, rp_n, atol=TOL), "scores mismatch (unmasked)"
    assert scores_f is None and jnp.allclose(out_f, ro_m, atol=TOL), \
        "output mismatch (flash masked)"
    assert jnp.allclose(out_fn, ro_n, atol=TOL), "output mismatch (flash unmasked)"
    assert jnp.allclose(out_b.astype(jnp.float32), ro_m, atol=1e-1), \
        "output mismatch (bf16)"
    assert jnp.allclose(scores_b.astype(jnp.float32), rp_m, atol=1e-1), \
        "scores mismatch (bf16)"
    # probabilities must sum to 1 along keys (exact reciprocal -> tight)
    assert jnp.allclose(jnp.sum(scores_m, axis=-1), 1.0, atol=1e-2), \
        "scores rows do not sum to 1"

    print("KERNEL_OK")
</pallas_src>

<mosaic_0001>
module attributes {stable_mosaic.version = 11 : i64} {
  func.func @_sdpa_scores_kernel(%arg0: i32, %arg1: i32, %arg2: memref<8x8xf32, #tpu.memory_space<vmem>>, %arg3: memref<4x8x32xf32, #tpu.memory_space<vmem>>, %arg4: memref<4x8x32xf32, #tpu.memory_space<vmem>>, %arg5: memref<4x8x32xf32, #tpu.memory_space<vmem>>, %arg6: memref<4x8x32xf32, #tpu.memory_space<vmem>>, %arg7: memref<4x8x8xf32, #tpu.memory_space<vmem>>) attributes {dimension_semantics = [#tpu.dimension_semantics<parallel>, #tpu.dimension_semantics<arbitrary>], iteration_bounds = array<i64: 1, 1>, scalar_prefetch = 0 : i64, scratch_operands = 0 : i64, tpu.core_type = #tpu.core_type<tc>, window_params = [{transform_indices = @transform_0, window_bounds = array<i64: 8, 8>}, {transform_indices = @transform_1, window_bounds = array<i64: 4, 8, 32>}, {transform_indices = @transform_2, window_bounds = array<i64: 4, 8, 32>}, {transform_indices = @transform_3, window_bounds = array<i64: 4, 8, 32>}, {transform_indices = @transform_4, window_bounds = array<i64: 4, 8, 32>}, {transform_indices = @transform_5, window_bounds = array<i64: 4, 8, 8>}]} {
    %c0 = arith.constant 0 : index
    %c0_0 = arith.constant 0 : index
    %c0_1 = arith.constant 0 : index
    %0 = vector.load %arg3[%c0, %c0_0, %c0_1] : memref<4x8x32xf32, #tpu.memory_space<vmem>>, vector<4x8x32xf32>
    %c0_2 = arith.constant 0 : index
    %c0_3 = arith.constant 0 : index
    %c0_4 = arith.constant 0 : index
    %1 = vector.load %arg4[%c0_2, %c0_3, %c0_4] : memref<4x8x32xf32, #tpu.memory_space<vmem>>, vector<4x8x32xf32>
    %c0_5 = arith.constant 0 : index
    %c0_6 = arith.constant 0 : index
    %c0_7 = arith.constant 0 : index
    %2 = vector.load %arg5[%c0_5, %c0_6, %c0_7] : memref<4x8x32xf32, #tpu.memory_space<vmem>>, vector<4x8x32xf32>
    %cst = arith.constant 0.176776692 : f32
    %3 = vector.broadcast %cst : f32 to vector<4x8x32xf32>
    %4 = arith.mulf %0, %3 : vector<4x8x32xf32>
    "tpu.trace_start"() <{level = 10 : i32, message = "gqd,gkd->gqk"}> : () -> ()
    %cst_8 = arith.constant dense<0.000000e+00> : vector<4x8x8xf32>
    %5 = tpu.matmul %4, %1, %cst_8 {dimension_numbers = #tpu.dot_dimension_numbers<[2], [2], [1], [1], [0, 0, 0, 1, 1, 1], [0], [0]>} : vector<4x8x32xf32>, vector<4x8x32xf32>, vector<4x8x8xf32> -> vector<4x8x8xf32>
    "tpu.trace_stop"() : () -> ()
    %c0_9 = arith.constant 0 : index
    %c0_10 = arith.constant 0 : index
    %6 = vector.load %arg2[%c0_9, %c0_10] : memref<8x8xf32, #tpu.memory_space<vmem>>, vector<8x8xf32>
    %7 = vector.shape_cast %6 : vector<8x8xf32> to vector<1x8x8xf32>
    %8 = vector.broadcast %7 : vector<1x8x8xf32> to vector<4x8x8xf32>
    %9 = arith.addf %5, %8 : vector<4x8x8xf32>
    %cst_11 = arith.constant dense<0xFF800000> : vector<4x8xf32>
    %10 = vector.multi_reduction <maximumf>, %9, %cst_11 [2] : vector<4x8x8xf32> to vector<4x8xf32>
    %11 = vector.shape_cast %10 : vector<4x8xf32> to vector<4x8x1xf32>
    %12 = vector.broadcast %11 : vector<4x8x1xf32> to vector<4x8x8xf32>
    %13 = arith.subf %9, %12 : vector<4x8x8xf32>
    %14 = math.exp %13 : vector<4x8x8xf32>
    %cst_12 = arith.constant dense<0.000000e+00> : vector<4x8xf32>
    %15 = vector.multi_reduction <add>, %14, %cst_12 [2] : vector<4x8x8xf32> to vector<4x8xf32>
    %16 = vector.shape_cast %15 : vector<4x8xf32> to vector<4x8x1xf32>
    %cst_13 = arith.constant 1.000000e+00 : f32
    %17 = vector.broadcast %cst_13 : f32 to vector<4x8x1xf32>
    %18 = arith.divf %17, %16 : vector<4x8x1xf32>
    %19 = vector.broadcast %18 : vector<4x8x1xf32> to vector<4x8x8xf32>
    %20 = arith.mulf %14, %19 : vector<4x8x8xf32>
    %c0_14 = arith.constant 0 : index
    %c0_15 = arith.constant 0 : index
    %c0_16 = arith.constant 0 : index
    %21 = vector.load %arg7[%c0_14, %c0_15, %c0_16] : memref<4x8x8xf32, #tpu.memory_space<vmem>>, vector<4x8x8xf32>
    tpu.vector_store %arg7[%c0_14, %c0_15, %c0_16], %20 {strides = array<i32>} : memref<4x8x8xf32, #tpu.memory_space<vmem>>, vector<4x8x8xf32>,
    %c0_17 = arith.constant 0 : index
    %c0_18 = arith.constant 0 : index
    %c0_19 = arith.constant 0 : index
    %22 = vector.load %arg7[%c0_17, %c0_18, %c0_19] : memref<4x8x8xf32, #tpu.memory_space<vmem>>, vector<4x8x8xf32>
    "tpu.trace_start"() <{level = 10 : i32, message = "gqk,gkd->gqd"}> : () -> ()
    %cst_20 = arith.constant dense<0.000000e+00> : vector<4x8x32xf32>
    %23 = tpu.matmul %22, %2, %cst_20 {dimension_numbers = #tpu.dot_dimension_numbers<[2], [1], [1], [2], [0, 0, 0, 1, 1, 2], [0], [0]>} : vector<4x8x8xf32>, vector<4x8x32xf32>, vector<4x8x32xf32> -> vector<4x8x32xf32>
    "tpu.trace_stop"() : () -> ()
    %c0_21 = arith.constant 0 : index
    %c0_22 = arith.constant 0 : index
    %c0_23 = arith.constant 0 : index
    %24 = vector.load %arg6[%c0_21, %c0_22, %c0_23] : memref<4x8x32xf32, #tpu.memory_space<vmem>>, vector<4x8x32xf32>
    tpu.vector_store %arg6[%c0_21, %c0_22, %c0_23], %23 {strides = array<i32>} : memref<4x8x32xf32, #tpu.memory_space<vmem>>, vector<4x8x32xf32>,
    return
  }
  func.func @transform_0(%arg0: i32, %arg1: i32) -> (i32, i32) {
    %c0_i32 = arith.constant 0 : i32
    %c0_i32_0 = arith.constant 0 : i32
    return %arg1, %c0_i32 : i32, i32
  }
  func.func @transform_1(%arg0: i32, %arg1: i32) -> (i32, i32, i32) {
    %c0_i32 = arith.constant 0 : i32
    %c0_i32_0 = arith.constant 0 : i32
    return %arg0, %arg1, %c0_i32 : i32, i32, i32
  }
  func.func @transform_2(%arg0: i32, %arg1: i32) -> (i32, i32, i32) {
    %c0_i32 = arith.constant 0 : i32
    %c0_i32_0 = arith.constant 0 : i32
    %c0_i32_1 = arith.constant 0 : i32
    return %arg0, %c0_i32, %c0_i32_0 : i32, i32, i32
  }
  func.func @transform_3(%arg0: i32, %arg1: i32) -> (i32, i32, i32) {
    %c0_i32 = arith.constant 0 : i32
    %c0_i32_0 = arith.constant 0 : i32
    %c0_i32_1 = arith.constant 0 : i32
    return %arg0, %c0_i32, %c0_i32_0 : i32, i32, i32
  }
  func.func @transform_4(%arg0: i32, %arg1: i32) -> (i32, i32, i32) {
    %c0_i32 = arith.constant 0 : i32
    %c0_i32_0 = arith.constant 0 : i32
    return %arg0, %arg1, %c0_i32 : i32, i32, i32
  }
  func.func @transform_5(%arg0: i32, %arg1: i32) -> (i32, i32, i32) {
    %c0_i32 = arith.constant 0 : i32
    %c0_i32_0 = arith.constant 0 : i32
    return %arg0, %arg1, %c0_i32 : i32, i32, i32
  }
}

</mosaic_0001>

<llo_original>
// kernel: tpu_custom_call.1
$region0: #{tpu_custom_call.1}
  #allocation0 [shape = 'u32[]', space=smem, size = 0x4, offset = 0x4, fixed_abs, tag = 'smem constant byte address 0x4 - core index']
  #allocation1 [shape = 'u32[144,128]{1,0:T(1,128)}', space=vmem, size = 0x12000, scoped, tag = 'internal scratch']
  %s0 = inlined_call_operand.hbm [shape: f32[8,8], index: 0, kind: input, shape index: {}]
  %s1 = inlined_call_operand.hbm [shape: f32[4,8,32], index: 1, kind: input, shape index: {}]
  %s2 = inlined_call_operand.hbm [shape: f32[4,8,32], index: 2, kind: input, shape index: {}]
  %s3 = inlined_call_operand.hbm [shape: f32[4,8,32], index: 3, kind: input, shape index: {}]
  %s4 = inlined_call_operand.hbm [shape: f32[4,8,32], index: 4, kind: output, shape index: {0}]
  %s5 = inlined_call_operand.hbm [shape: f32[4,8,8], index: 5, kind: output, shape index: {1}]
  %6 = xla_tuple %s4, %s5
  %s7 = sld [smem:[#allocation0]]
  $region50: #{tpu_custom_call.1} parent=0
    _
  %s9 = ssub.s32 1, %s7
  %s10 = scalar_select 0, %s9, %s7
  $region1: #{tpu_custom_call.1} parent=0
    #allocation2 [shape = 'u8[4096]{0}', space=vmem, size = 0x1000, scoped, tag = 'input window, operand 0, single buffered']
    #allocation3 [shape = 's32[1]{0}', space=sflag, size = 0x4, scoped, tag = 'scoped memory for tpu_custom_call.1']
    #allocation4 [shape = 's32[1]{0}', space=sflag, size = 0x4, scoped, tag = 'scoped memory for tpu_custom_call.1']
    #allocation5 [shape = 'u8[16384]{0}', space=vmem, size = 0x4000, scoped, tag = 'input window, operand 1, single buffered']
    #allocation6 [shape = 's32[1]{0}', space=sflag, size = 0x4, scoped, tag = 'scoped memory for tpu_custom_call.1']
    #allocation7 [shape = 'u8[16384]{0}', space=vmem, size = 0x4000, scoped, tag = 'input window, operand 2, single buffered']
    #allocation8 [shape = 'u8[16384]{0}', space=vmem, size = 0x4000, scoped, tag = 'input window, operand 3, single buffered']
    #allocation9 [shape = 's32[1]{0}', space=sflag, size = 0x4, scoped, tag = 'scoped memory for tpu_custom_call.1']
    #allocation10 [shape = 'u8[16384]{0}', space=vmem, size = 0x4000, scoped, tag = 'output window, operand 0, single buffered']
    #allocation11 [shape = 'u8[16384]{0}', space=vmem, size = 0x4000, scoped, tag = 'output window, operand 1, single buffered']
    #allocation12 [shape = 's32[1]{0}', space=sflag, size = 0x4, scoped, tag = 'scoped memory for tpu_custom_call.1']
    %11 = vsyncpa [#allocation3], 0
    %12 = vsyncpa [#allocation6], 0
    %13 = vsyncpa [#allocation9], 0
    %14 = vsyncpa [#allocation4], 0
    %15 = vsyncpa [#allocation12], 0
    // Predicated region
    $region2: #{tpu_custom_call.1} parent=1 // pred_check
      _
    $region3: #{tpu_custom_call.1} parent=1 // pred_check_branch
      %17 = sbr.rel (0) target = $region5
    $region4: #{tpu_custom_call.1} parent=1 // pred_region
      %s19 = ssub.s32 128, 128
      %20 = vsyncadd [#allocation3], %s19
      %s22 = sshll.u32 [#allocation2], 4
      %s23 = int_to_ptr.vmem [resolvable:$true] %s22
      %25 = dma.hbm_to_vmem [thread:$0]  %s0, 128, %s23, [#allocation3]
    $region5: #{tpu_custom_call.1} parent=1 // pred_fallthru
      _
    // Predicated region
    $region6: #{tpu_custom_call.1} parent=1 // pred_check
      _
    $region7: #{tpu_custom_call.1} parent=1 // pred_check_branch
      %27 = sbr.rel (0) target = $region9
    $region8: #{tpu_custom_call.1} parent=1 // pred_region
      %s29 = ssub.s32 512, 512
      %30 = vsyncadd [#allocation6], %s29
      %s31 = sshll.u32 [#allocation5], 4
      %s32 = int_to_ptr.vmem [resolvable:$true] %s31
      %37 = dma.hbm_to_vmem [thread:$0]  %s1, 512, %s32, [#allocation6], 128, 128, 8
    $region9: #{tpu_custom_call.1} parent=1 // pred_fallthru
      _
    // Predicated region
    $region10: #{tpu_custom_call.1} parent=1 // pred_check
      _
    $region11: #{tpu_custom_call.1} parent=1 // pred_check_branch
      %39 = sbr.rel (0) target = $region13
    $region12: #{tpu_custom_call.1} parent=1 // pred_region
      %s41 = ssub.s32 512, 512
      %42 = vsyncadd [#allocation6], %s41
      %s43 = sshll.u32 [#allocation7], 4
      %s44 = int_to_ptr.vmem [resolvable:$true] %s43
      %49 = dma.hbm_to_vmem [thread:$0]  %s2, 512, %s44, [#allocation6], 128, 128, 8
    $region13: #{tpu_custom_call.1} parent=1 // pred_fallthru
      _
    // Predicated region
    $region14: #{tpu_custom_call.1} parent=1 // pred_check
      _
    $region15: #{tpu_custom_call.1} parent=1 // pred_check_branch
      %51 = sbr.rel (0) target = $region17
    $region16: #{tpu_custom_call.1} parent=1 // pred_region
      %s53 = ssub.s32 512, 512
      %54 = vsyncadd [#allocation9], %s53
      %s55 = sshll.u32 [#allocation8], 4
      %s56 = int_to_ptr.vmem [resolvable:$true] %s55
      %61 = dma.hbm_to_vmem [thread:$0]  %s3, 512, %s56, [#allocation9], 128, 128, 8
    $region17: #{tpu_custom_call.1} parent=1 // pred_fallthru
      _
    // Predicated region
    $region18: #{tpu_custom_call.1} parent=1 // pred_check
      _
    $region19: #{tpu_custom_call.1} parent=1 // pred_check_branch
      %63 = sbr.rel (0) target = $region21
    $region20: #{tpu_custom_call.1} parent=1 // pred_region
      %64 = dma.done [#allocation3], 128
    $region21: #{tpu_custom_call.1} parent=1 // pred_fallthru
      _
    // Predicated region
    $region22: #{tpu_custom_call.1} parent=1 // pred_check
      _
    $region23: #{tpu_custom_call.1} parent=1 // pred_check_branch
      %66 = sbr.rel (0) target = $region25
    $region24: #{tpu_custom_call.1} parent=1 // pred_region
      %67 = dma.done [#allocation6], 512
    $region25: #{tpu_custom_call.1} parent=1 // pred_fallthru
      _
    // Predicated region
    $region26: #{tpu_custom_call.1} parent=1 // pred_check
      _
    $region27: #{tpu_custom_call.1} parent=1 // pred_check_branch
      %69 = sbr.rel (0) target = $region29
    $region28: #{tpu_custom_call.1} parent=1 // pred_region
      %70 = dma.done [#allocation6], 512
    $region29: #{tpu_custom_call.1} parent=1 // pred_fallthru
      _
    // Predicated region
    $region30: #{tpu_custom_call.1} parent=1 // pred_check
      _
    $region31: #{tpu_custom_call.1} parent=1 // pred_check_branch
      %72 = sbr.rel (0) target = $region33
    $region32: #{tpu_custom_call.1} parent=1 // pred_region
      %73 = dma.done [#allocation9], 512
    $region33: #{tpu_custom_call.1} parent=1 // pred_fallthru
      _
    %v74 = vld [vmem:[#allocation5] sm:$0xff]
    %v75 = vld [vmem:[#allocation5 + $0x8] sm:$0xff]
    %v76 = vld [vmem:[#allocation5 + $0x10] sm:$0xff]
    %v77 = vld [vmem:[#allocation5 + $0x18] sm:$0xff]
    %v78 = vld [vmem:[#allocation7] sm:$0xff]
    %v79 = vld [vmem:[#allocation7 + $0x8] sm:$0xff]
    %v80 = vld [vmem:[#allocation7 + $0x10] sm:$0xff]
    %v81 = vld [vmem:[#allocation7 + $0x18] sm:$0xff]
    %v82 = vld [vmem:[#allocation8] sm:$0xff]
    %v83 = vld [vmem:[#allocation8 + $0x8] sm:$0xff]
    %v84 = vld [vmem:[#allocation8 + $0x10] sm:$0xff]
    %v85 = vld [vmem:[#allocation8 + $0x18] sm:$0xff]
    %v86 = vmul.f32 %v74, 0.17677669
    %v87 = vmul.f32 %v75, 0.17677669
    %v88 = vmul.f32 %v76, 0.17677669
    %v89 = vmul.f32 %v77, 0.17677669
    %v90 = vld [vmem:[#allocation2] sm:$0xff]
    %vm91 = vcmask 261120
    %v93 = vsel %vm91, %v86, 0
    %v96 = vsel %vm91, %v78, 0
    %98 = vmatprep.subr.mxu0 0.0
    %99 = vmatpush1.xpose.msra.mxu0 0.0
    %100 = vmatprep.subr.mxu0 0.0
    %101 = vmatpush1.xpose.msra.mxu0 0.0
    %102 = vmatprep.subr.mxu0 0.0
    %103 = vmatpush1.xpose.msra.mxu0 0.0
    %104 = vmatprep.subr.mxu0 0.0
    %105 = vmatpush1.xpose.msra.mxu0 0.0
    %106 = vmatprep.subr.mxu0 0.0
    %107 = vmatpush1.xpose.msra.mxu0 0.0
    %108 = vmatprep.subr.mxu0 0.0
    %109 = vmatpush1.xpose.msra.mxu0 0.0
    %110 = vmatprep.subr.mxu0 0.0
    %111 = vmatpush1.xpose.msra.mxu0 0.0
    %112 = vmatprep.subr.mxu0 0.0
    %113 = vmatpush1.xpose.msra.mxu0 0.0
    %114 = vmatprep.subr.mxu0 0.0
    %115 = vmatpush1.xpose.msra.mxu0 0.0
    %116 = vmatprep.subr.mxu0 0.0
    %117 = vmatpush1.xpose.msra.mxu0 0.0
    %118 = vmatprep.subr.mxu0 0.0
    %119 = vmatpush1.xpose.msra.mxu0 0.0
    %120 = vmatprep.subr.mxu0 0.0
    %121 = vmatpush1.xpose.msra.mxu0 0.0
    %122 = vmatprep.subr.mxu0 0.0
    %123 = vmatpush1.xpose.msra.mxu0 0.0
    %124 = vmatprep.subr.mxu0 0.0
    %125 = vmatpush1.xpose.msra.mxu0 0.0
    %126 = vmatprep.subr.mxu0 0.0
    %127 = vmatpush1.xpose.msra.mxu0 0.0
    %128 = vmatprep.subr.mxu0 0.0
    %129 = vmatpush1.xpose.msra.mxu0 %v96
    %130 = vmatprep.subr.mxu0 0.0
    %131 = vmatpush2.xpose.msra.mxu0 0.0
    %132 = vmatprep.subr.mxu0 0.0
    %133 = vmatpush2.xpose.msra.mxu0 0.0
    %134 = vmatprep.subr.mxu0 0.0
    %135 = vmatpush2.xpose.msra.mxu0 0.0
    %136 = vmatprep.subr.mxu0 0.0
    %137 = vmatpush2.xpose.msra.mxu0 0.0
    %138 = vmatprep.subr.mxu0 0.0
    %139 = vmatpush2.xpose.msra.mxu0 0.0
    %140 = vmatprep.subr.mxu0 0.0
    %141 = vmatpush2.xpose.msra.mxu0 0.0
    %142 = vmatprep.subr.mxu0 0.0
    %143 = vmatpush2.xpose.msra.mxu0 0.0
    %144 = vmatprep.subr.mxu0 0.0
    %145 = vmatpush2.xpose.msra.mxu0 0.0
    %146 = vmatprep.subr.mxu0 0.0
    %147 = vmatpush2.xpose.msra.mxu0 0.0
    %148 = vmatprep.subr.mxu0 0.0
    %149 = vmatpush2.xpose.msra.mxu0 0.0
    %150 = vmatprep.subr.mxu0 0.0
    %151 = vmatpush2.xpose.msra.mxu0 0.0
    %152 = vmatprep.subr.mxu0 0.0
    %153 = vmatpush2.xpose.msra.mxu0 0.0
    %154 = vmatprep.subr.mxu0 0.0
    %155 = vmatpush2.xpose.msra.mxu0 0.0
    %156 = vmatprep.subr.mxu0 0.0
    %157 = vmatpush2.xpose.msra.mxu0 0.0
    %158 = vmatprep.subr.mxu0 0.0
    %159 = vmatpush2.xpose.msra.mxu0 0.0
    %160 = vmatprep.subr.mxu0 0.0
    %161 = vmatpush2.xpose.msra.mxu0 0.0
    %162 = vmatprep.mubr.f32.mxu0 0.0
    %163 = vmatmul.mubr.f32.gmra.mxu0 %v93
    %v164 = vpop.f32.mrf.mxu0
    %v165 = vadd.f32 %v90, %v164
    %v166 = vpop.f32.mrf.mxu0
    %167 = vdwg.mxu0
    %v169 = vsel %vm91, %v87, 0
    %v172 = vsel %vm91, %v79, 0
    %174 = vmatprep.subr.mxu0 0.0
    %175 = vmatpush1.xpose.msra.mxu0 0.0
    %176 = vmatprep.subr.mxu0 0.0
    %177 = vmatpush1.xpose.msra.mxu0 0.0
    %178 = vmatprep.subr.mxu0 0.0
    %179 = vmatpush1.xpose.msra.mxu0 0.0
    %180 = vmatprep.subr.mxu0 0.0
    %181 = vmatpush1.xpose.msra.mxu0 0.0
    %182 = vmatprep.subr.mxu0 0.0
    %183 = vmatpush1.xpose.msra.mxu0 0.0
    %184 = vmatprep.subr.mxu0 0.0
    %185 = vmatpush1.xpose.msra.mxu0 0.0
    %186 = vmatprep.subr.mxu0 0.0
    %187 = vmatpush1.xpose.msra.mxu0 0.0
    %188 = vmatprep.subr.mxu0 0.0
    %189 = vmatpush1.xpose.msra.mxu0 0.0
    %190 = vmatprep.subr.mxu0 0.0
    %191 = vmatpush1.xpose.msra.mxu0 0.0
    %192 = vmatprep.subr.mxu0 0.0
    %193 = vmatpush1.xpose.msra.mxu0 0.0
    %194 = vmatprep.subr.mxu0 0.0
    %195 = vmatpush1.xpose.msra.mxu0 0.0
    %196 = vmatprep.subr.mxu0 0.0
    %197 = vmatpush1.xpose.msra.mxu0 0.0
    %198 = vmatprep.subr.mxu0 0.0
    %199 = vmatpush1.xpose.msra.mxu0 0.0
    %200 = vmatprep.subr.mxu0 0.0
    %201 = vmatpush1.xpose.msra.mxu0 0.0
    %202 = vmatprep.subr.mxu0 0.0
    %203 = vmatpush1.xpose.msra.mxu0 0.0
    %204 = vmatprep.subr.mxu0 0.0
    %205 = vmatpush1.xpose.msra.mxu0 %v172
    %206 = vmatprep.subr.mxu0 0.0
    %207 = vmatpush2.xpose.msra.mxu0 0.0
    %208 = vmatprep.subr.mxu0 0.0
    %209 = vmatpush2.xpose.msra.mxu0 0.0
    %210 = vmatprep.subr.mxu0 0.0
    %211 = vmatpush2.xpose.msra.mxu0 0.0
    %212 = vmatprep.subr.mxu0 0.0
    %213 = vmatpush2.xpose.msra.mxu0 0.0
    %214 = vmatprep.subr.mxu0 0.0
    %215 = vmatpush2.xpose.msra.mxu0 0.0
    %216 = vmatprep.subr.mxu0 0.0
    %217 = vmatpush2.xpose.msra.mxu0 0.0
    %218 = vmatprep.subr.mxu0 0.0
    %219 = vmatpush2.xpose.msra.mxu0 0.0
    %220 = vmatprep.subr.mxu0 0.0
    %221 = vmatpush2.xpose.msra.mxu0 0.0
    %222 = vmatprep.subr.mxu0 0.0
    %223 = vmatpush2.xpose.msra.mxu0 0.0
    %224 = vmatprep.subr.mxu0 0.0
    %225 = vmatpush2.xpose.msra.mxu0 0.0
    %226 = vmatprep.subr.mxu0 0.0
    %227 = vmatpush2.xpose.msra.mxu0 0.0
    %228 = vmatprep.subr.mxu0 0.0
    %229 = vmatpush2.xpose.msra.mxu0 0.0
    %230 = vmatprep.subr.mxu0 0.0
    %231 = vmatpush2.xpose.msra.mxu0 0.0
    %232 = vmatprep.subr.mxu0 0.0
    %233 = vmatpush2.xpose.msra.mxu0 0.0
    %234 = vmatprep.subr.mxu0 0.0
    %235 = vmatpush2.xpose.msra.mxu0 0.0
    %236 = vmatprep.subr.mxu0 0.0
    %237 = vmatpush2.xpose.msra.mxu0 0.0
    %238 = vmatprep.mubr.f32.mxu0 0.0
    %239 = vmatmul.mubr.f32.gmra.mxu0 %v169
    %v240 = vpop.f32.mrf.mxu0
    %v241 = vadd.f32 %v90, %v240
    %v242 = vpop.f32.mrf.mxu0
    %243 = vdwg.mxu0
    %v245 = vsel %vm91, %v88, 0
    %v248 = vsel %vm91, %v80, 0
    %250 = vmatprep.subr.mxu0 0.0
    %251 = vmatpush1.xpose.msra.mxu0 0.0
    %252 = vmatprep.subr.mxu0 0.0
    %253 = vmatpush1.xpose.msra.mxu0 0.0
    %254 = vmatprep.subr.mxu0 0.0
    %255 = vmatpush1.xpose.msra.mxu0 0.0
    %256 = vmatprep.subr.mxu0 0.0
    %257 = vmatpush1.xpose.msra.mxu0 0.0
    %258 = vmatprep.subr.mxu0 0.0
    %259 = vmatpush1.xpose.msra.mxu0 0.0
    %260 = vmatprep.subr.mxu0 0.0
    %261 = vmatpush1.xpose.msra.mxu0 0.0
    %262 = vmatprep.subr.mxu0 0.0
    %263 = vmatpush1.xpose.msra.mxu0 0.0
    %264 = vmatprep.subr.mxu0 0.0
    %265 = vmatpush1.xpose.msra.mxu0 0.0
    %266 = vmatprep.subr.mxu0 0.0
    %267 = vmatpush1.xpose.msra.mxu0 0.0
    %268 = vmatprep.subr.mxu0 0.0
    %269 = vmatpush1.xpose.msra.mxu0 0.0
    %270 = vmatprep.subr.mxu0 0.0
    %271 = vmatpush1.xpose.msra.mxu0 0.0
    %272 = vmatprep.subr.mxu0 0.0
    %273 = vmatpush1.xpose.msra.mxu0 0.0
    %274 = vmatprep.subr.mxu0 0.0
    %275 = vmatpush1.xpose.msra.mxu0 0.0
    %276 = vmatprep.subr.mxu0 0.0
    %277 = vmatpush1.xpose.msra.mxu0 0.0
    %278 = vmatprep.subr.mxu0 0.0
    %279 = vmatpush1.xpose.msra.mxu0 0.0
    %280 = vmatprep.subr.mxu0 0.0
    %281 = vmatpush1.xpose.msra.mxu0 %v248
    %282 = vmatprep.subr.mxu0 0.0
    %283 = vmatpush2.xpose.msra.mxu0 0.0
    %284 = vmatprep.subr.mxu0 0.0
    %285 = vmatpush2.xpose.msra.mxu0 0.0
    %286 = vmatprep.subr.mxu0 0.0
    %287 = vmatpush2.xpose.msra.mxu0 0.0
    %288 = vmatprep.subr.mxu0 0.0
    %289 = vmatpush2.xpose.msra.mxu0 0.0
    %290 = vmatprep.subr.mxu0 0.0
    %291 = vmatpush2.xpose.msra.mxu0 0.0
    %292 = vmatprep.subr.mxu0 0.0
    %293 = vmatpush2.xpose.msra.mxu0 0.0
    %294 = vmatprep.subr.mxu0 0.0
    %295 = vmatpush2.xpose.msra.mxu0 0.0
    %296 = vmatprep.subr.mxu0 0.0
    %297 = vmatpush2.xpose.msra.mxu0 0.0
    %298 = vmatprep.subr.mxu0 0.0
    %299 = vmatpush2.xpose.msra.mxu0 0.0
    %300 = vmatprep.subr.mxu0 0.0
    %301 = vmatpush2.xpose.msra.mxu0 0.0
    %302 = vmatprep.subr.mxu0 0.0
    %303 = vmatpush2.xpose.msra.mxu0 0.0
    %304 = vmatprep.subr.mxu0 0.0
    %305 = vmatpush2.xpose.msra.mxu0 0.0
    %306 = vmatprep.subr.mxu0 0.0
    %307 = vmatpush2.xpose.msra.mxu0 0.0
    %308 = vmatprep.subr.mxu0 0.0
    %309 = vmatpush2.xpose.msra.mxu0 0.0
    %310 = vmatprep.subr.mxu0 0.0
    %311 = vmatpush2.xpose.msra.mxu0 0.0
    %312 = vmatprep.subr.mxu0 0.0
    %313 = vmatpush2.xpose.msra.mxu0 0.0
    %314 = vmatprep.mubr.f32.mxu0 0.0
    %315 = vmatmul.mubr.f32.gmra.mxu0 %v245
    %v316 = vpop.f32.mrf.mxu0
    %v317 = vadd.f32 %v90, %v316
    %v318 = vpop.f32.mrf.mxu0
    %319 = vdwg.mxu0
    %v321 = vsel %vm91, %v89, 0
    %v324 = vsel %vm91, %v81, 0
    %326 = vmatprep.subr.mxu0 0.0
    %327 = vmatpush1.xpose.msra.mxu0 0.0
    %328 = vmatprep.subr.mxu0 0.0
    %329 = vmatpush1.xpose.msra.mxu0 0.0
    %330 = vmatprep.subr.mxu0 0.0
    %331 = vmatpush1.xpose.msra.mxu0 0.0
    %332 = vmatprep.subr.mxu0 0.0
    %333 = vmatpush1.xpose.msra.mxu0 0.0
    %334 = vmatprep.subr.mxu0 0.0
    %335 = vmatpush1.xpose.msra.mxu0 0.0
    %336 = vmatprep.subr.mxu0 0.0
    %337 = vmatpush1.xpose.msra.mxu0 0.0
    %338 = vmatprep.subr.mxu0 0.0
    %339 = vmatpush1.xpose.msra.mxu0 0.0
    %340 = vmatprep.subr.mxu0 0.0
    %341 = vmatpush1.xpose.msra.mxu0 0.0
    %342 = vmatprep.subr.mxu0 0.0
    %343 = vmatpush1.xpose.msra.mxu0 0.0
    %344 = vmatprep.subr.mxu0 0.0
    %345 = vmatpush1.xpose.msra.mxu0 0.0
    %346 = vmatprep.subr.mxu0 0.0
    %347 = vmatpush1.xpose.msra.mxu0 0.0
    %348 = vmatprep.subr.mxu0 0.0
    %349 = vmatpush1.xpose.msra.mxu0 0.0
    %350 = vmatprep.subr.mxu0 0.0
    %351 = vmatpush1.xpose.msra.mxu0 0.0
    %352 = vmatprep.subr.mxu0 0.0
    %353 = vmatpush1.xpose.msra.mxu0 0.0
    %354 = vmatprep.subr.mxu0 0.0
    %355 = vmatpush1.xpose.msra.mxu0 0.0
    %356 = vmatprep.subr.mxu0 0.0
    %357 = vmatpush1.xpose.msra.mxu0 %v324
    %358 = vmatprep.subr.mxu0 0.0
    %359 = vmatpush2.xpose.msra.mxu0 0.0
    %360 = vmatprep.subr.mxu0 0.0
    %361 = vmatpush2.xpose.msra.mxu0 0.0
    %362 = vmatprep.subr.mxu0 0.0
    %363 = vmatpush2.xpose.msra.mxu0 0.0
    %364 = vmatprep.subr.mxu0 0.0
    %365 = vmatpush2.xpose.msra.mxu0 0.0
    %366 = vmatprep.subr.mxu0 0.0
    %367 = vmatpush2.xpose.msra.mxu0 0.0
    %368 = vmatprep.subr.mxu0 0.0
    %369 = vmatpush2.xpose.msra.mxu0 0.0
    %370 = vmatprep.subr.mxu0 0.0
    %371 = vmatpush2.xpose.msra.mxu0 0.0
    %372 = vmatprep.subr.mxu0 0.0
    %373 = vmatpush2.xpose.msra.mxu0 0.0
    %374 = vmatprep.subr.mxu0 0.0
    %375 = vmatpush2.xpose.msra.mxu0 0.0
    %376 = vmatprep.subr.mxu0 0.0
    %377 = vmatpush2.xpose.msra.mxu0 0.0
    %378 = vmatprep.subr.mxu0 0.0
    %379 = vmatpush2.xpose.msra.mxu0 0.0
    %380 = vmatprep.subr.mxu0 0.0
    %381 = vmatpush2.xpose.msra.mxu0 0.0
    %382 = vmatprep.subr.mxu0 0.0
    %383 = vmatpush2.xpose.msra.mxu0 0.0
    %384 = vmatprep.subr.mxu0 0.0
    %385 = vmatpush2.xpose.msra.mxu0 0.0
    %386 = vmatprep.subr.mxu0 0.0
    %387 = vmatpush2.xpose.msra.mxu0 0.0
    %388 = vmatprep.subr.mxu0 0.0
    %389 = vmatpush2.xpose.msra.mxu0 0.0
    %390 = vmatprep.mubr.f32.mxu0 0.0
    %391 = vmatmul.mubr.f32.gmra.mxu0 %v321
    %v392 = vpop.f32.mrf.mxu0
    %v393 = vadd.f32 %v90, %v392
    %v394 = vpop.f32.mrf.mxu0
    %395 = vdwg.mxu0
    %vm396 = vcmask 64512
    %v397 = vsel %vm396, %v165, -inf
    %398 = vmax.xlane.f32.xlu0 %v397
    %v399 = vpop.xlane.xlu0 %398
    %v400 = vsel %vm396, %v241, -inf
    %401 = vmax.xlane.f32.xlu0 %v400
    %v402 = vpop.xlane.xlu0 %401
    %v403 = vsel %vm396, %v317, -inf
    %404 = vmax.xlane.f32.xlu0 %v403
    %v405 = vpop.xlane.xlu0 %404
    %v406 = vsel %vm396, %v393, -inf
    %407 = vmax.xlane.f32.xlu0 %v406
    %v408 = vpop.xlane.xlu0 %407
    %v409 = vsub.f32 %v165, %v399
    %v410 = vsub.f32 %v241, %v402
    %v411 = vsub.f32 %v317, %v405
    %v412 = vsub.f32 %v393, %v408
    %v413 = vmul.f32 %v409, 1.442695
    %v414 = vpow.pop %v413
    %v415 = vmul.f32 %v410, 1.442695
    %v416 = vpow.pop %v415
    %v417 = vmul.f32 %v411, 1.442695
    %v418 = vpow.pop %v417
    %v419 = vmul.f32 %v412, 1.442695
    %v420 = vpow.pop %v419
    %v421 = vsel %vm396, %v414, 0.0
    %422 = vadd.xlane.f32.xlu0 %v421
    %v423 = vpop.xlane.xlu0 %422
    %v424 = vsel %vm396, %v416, 0.0
    %425 = vadd.xlane.f32.xlu0 %v424
    %v426 = vpop.xlane.xlu0 %425
    %v427 = vsel %vm396, %v418, 0.0
    %428 = vadd.xlane.f32.xlu0 %v427
    %v429 = vpop.xlane.xlu0 %428
    %v430 = vsel %vm396, %v420, 0.0
    %431 = vadd.xlane.f32.xlu0 %v430
    %v432 = vpop.xlane.xlu0 %431
    %v433 = vrcp.pop %v423
    %v434 = vmul.f32 1.0, %v433
    %v435 = vrcp.pop %v426
    %v436 = vmul.f32 1.0, %v435
    %v437 = vrcp.pop %v429
    %v438 = vmul.f32 1.0, %v437
    %v439 = vrcp.pop %v432
    %v440 = vmul.f32 1.0, %v439
    %v441 = vmul.f32 %v414, %v434
    %v442 = vmul.f32 %v416, %v436
    %v443 = vmul.f32 %v418, %v438
    %v444 = vmul.f32 %v420, %v440
    %445 = vst.msk [vmem:[#allocation11] sm:$0xff] %vm396, %v441
    %446 = vst.msk [vmem:[#allocation11 + $0x8] sm:$0xff] %vm396, %v442
    %447 = vst.msk [vmem:[#allocation11 + $0x10] sm:$0xff] %vm396, %v443
    %448 = vst.msk [vmem:[#allocation11 + $0x18] sm:$0xff] %vm396, %v444
    %v449 = vld [vmem:[#allocation11] sm:$0xff]
    %v450 = vld [vmem:[#allocation11 + $0x8] sm:$0xff]
    %v451 = vld [vmem:[#allocation11 + $0x10] sm:$0xff]
    %v452 = vld [vmem:[#allocation11 + $0x18] sm:$0xff]
    %v454 = vsel %vm396, %v449, 0
    %456 = vmatprep.subr.mxu0 0.0
    %457 = vmatpush1.msra.mxu0 0.0
    %458 = vmatprep.subr.mxu0 0.0
    %459 = vmatpush1.msra.mxu0 0.0
    %460 = vmatprep.subr.mxu0 0.0
    %461 = vmatpush1.msra.mxu0 0.0
    %462 = vmatprep.subr.mxu0 0.0
    %463 = vmatpush1.msra.mxu0 0.0
    %464 = vmatprep.subr.mxu0 0.0
    %465 = vmatpush1.msra.mxu0 0.0
    %466 = vmatprep.subr.mxu0 0.0
    %467 = vmatpush1.msra.mxu0 0.0
    %468 = vmatprep.subr.mxu0 0.0
    %469 = vmatpush1.msra.mxu0 0.0
    %470 = vmatprep.subr.mxu0 0.0
    %471 = vmatpush1.msra.mxu0 0.0
    %472 = vmatprep.subr.mxu0 0.0
    %473 = vmatpush1.msra.mxu0 0.0
    %474 = vmatprep.subr.mxu0 0.0
    %475 = vmatpush1.msra.mxu0 0.0
    %476 = vmatprep.subr.mxu0 0.0
    %477 = vmatpush1.msra.mxu0 0.0
    %478 = vmatprep.subr.mxu0 0.0
    %479 = vmatpush1.msra.mxu0 0.0
    %480 = vmatprep.subr.mxu0 0.0
    %481 = vmatpush1.msra.mxu0 0.0
    %482 = vmatprep.subr.mxu0 0.0
    %483 = vmatpush1.msra.mxu0 0.0
    %484 = vmatprep.subr.mxu0 0.0
    %485 = vmatpush1.msra.mxu0 0.0
    %486 = vmatprep.subr.mxu0 0.0
    %487 = vmatpush1.msra.mxu0 %v82
    %488 = vmatprep.subr.mxu0 0.0
    %489 = vmatpush2.msra.mxu0 0.0
    %490 = vmatprep.subr.mxu0 0.0
    %491 = vmatpush2.msra.mxu0 0.0
    %492 = vmatprep.subr.mxu0 0.0
    %493 = vmatpush2.msra.mxu0 0.0
    %494 = vmatprep.subr.mxu0 0.0
    %495 = vmatpush2.msra.mxu0 0.0
    %496 = vmatprep.subr.mxu0 0.0
    %497 = vmatpush2.msra.mxu0 0.0
    %498 = vmatprep.subr.mxu0 0.0
    %499 = vmatpush2.msra.mxu0 0.0
    %500 = vmatprep.subr.mxu0 0.0
    %501 = vmatpush2.msra.mxu0 0.0
    %502 = vmatprep.subr.mxu0 0.0
    %503 = vmatpush2.msra.mxu0 0.0
    %504 = vmatprep.subr.mxu0 0.0
    %505 = vmatpush2.msra.mxu0 0.0
    %506 = vmatprep.subr.mxu0 0.0
    %507 = vmatpush2.msra.mxu0 0.0
    %508 = vmatprep.subr.mxu0 0.0
    %509 = vmatpush2.msra.mxu0 0.0
    %510 = vmatprep.subr.mxu0 0.0
    %511 = vmatpush2.msra.mxu0 0.0
    %512 = vmatprep.subr.mxu0 0.0
    %513 = vmatpush2.msra.mxu0 0.0
    %514 = vmatprep.subr.mxu0 0.0
    %515 = vmatpush2.msra.mxu0 0.0
    %516 = vmatprep.subr.mxu0 0.0
    %517 = vmatpush2.msra.mxu0 0.0
    %518 = vmatprep.subr.mxu0 0.0
    %519 = vmatpush2.msra.mxu0 0.0
    %520 = vmatprep.mubr.f32.mxu0 0.0
    %521 = vmatmul.mubr.f32.gmra.mxu0 %v454
    %v522 = vpop.f32.mrf.mxu0
    %v523 = vadd.f32 0.0, %v522
    %v524 = vpop.f32.mrf.mxu0
    %525 = vdwg.mxu0
    %v527 = vsel %vm396, %v450, 0
    %529 = vmatprep.subr.mxu0 0.0
    %530 = vmatpush1.msra.mxu0 0.0
    %531 = vmatprep.subr.mxu0 0.0
    %532 = vmatpush1.msra.mxu0 0.0
    %533 = vmatprep.subr.mxu0 0.0
    %534 = vmatpush1.msra.mxu0 0.0
    %535 = vmatprep.subr.mxu0 0.0
    %536 = vmatpush1.msra.mxu0 0.0
    %537 = vmatprep.subr.mxu0 0.0
    %538 = vmatpush1.msra.mxu0 0.0
    %539 = vmatprep.subr.mxu0 0.0
    %540 = vmatpush1.msra.mxu0 0.0
    %541 = vmatprep.subr.mxu0 0.0
    %542 = vmatpush1.msra.mxu0 0.0
    %543 = vmatprep.subr.mxu0 0.0
    %544 = vmatpush1.msra.mxu0 0.0
    %545 = vmatprep.subr.mxu0 0.0
    %546 = vmatpush1.msra.mxu0 0.0
    %547 = vmatprep.subr.mxu0 0.0
    %548 = vmatpush1.msra.mxu0 0.0
    %549 = vmatprep.subr.mxu0 0.0
    %550 = vmatpush1.msra.mxu0 0.0
    %551 = vmatprep.subr.mxu0 0.0
    %552 = vmatpush1.msra.mxu0 0.0
    %553 = vmatprep.subr.mxu0 0.0
    %554 = vmatpush1.msra.mxu0 0.0
    %555 = vmatprep.subr.mxu0 0.0
    %556 = vmatpush1.msra.mxu0 0.0
    %557 = vmatprep.subr.mxu0 0.0
    %558 = vmatpush1.msra.mxu0 0.0
    %559 = vmatprep.subr.mxu0 0.0
    %560 = vmatpush1.msra.mxu0 %v83
    %561 = vmatprep.subr.mxu0 0.0
    %562 = vmatpush2.msra.mxu0 0.0
    %563 = vmatprep.subr.mxu0 0.0
    %564 = vmatpush2.msra.mxu0 0.0
    %565 = vmatprep.subr.mxu0 0.0
    %566 = vmatpush2.msra.mxu0 0.0
    %567 = vmatprep.subr.mxu0 0.0
    %568 = vmatpush2.msra.mxu0 0.0
    %569 = vmatprep.subr.mxu0 0.0
    %570 = vmatpush2.msra.mxu0 0.0
    %571 = vmatprep.subr.mxu0 0.0
    %572 = vmatpush2.msra.mxu0 0.0
    %573 = vmatprep.subr.mxu0 0.0
    %574 = vmatpush2.msra.mxu0 0.0
    %575 = vmatprep.subr.mxu0 0.0
    %576 = vmatpush2.msra.mxu0 0.0
    %577 = vmatprep.subr.mxu0 0.0
    %578 = vmatpush2.msra.mxu0 0.0
    %579 = vmatprep.subr.mxu0 0.0
    %580 = vmatpush2.msra.mxu0 0.0
    %581 = vmatprep.subr.mxu0 0.0
    %582 = vmatpush2.msra.mxu0 0.0
    %583 = vmatprep.subr.mxu0 0.0
    %584 = vmatpush2.msra.mxu0 0.0
    %585 = vmatprep.subr.mxu0 0.0
    %586 = vmatpush2.msra.mxu0 0.0
    %587 = vmatprep.subr.mxu0 0.0
    %588 = vmatpush2.msra.mxu0 0.0
    %589 = vmatprep.subr.mxu0 0.0
    %590 = vmatpush2.msra.mxu0 0.0
    %591 = vmatprep.subr.mxu0 0.0
    %592 = vmatpush2.msra.mxu0 0.0
    %593 = vmatprep.mubr.f32.mxu0 0.0
    %594 = vmatmul.mubr.f32.gmra.mxu0 %v527
    %v595 = vpop.f32.mrf.mxu0
    %v596 = vadd.f32 0.0, %v595
    %v597 = vpop.f32.mrf.mxu0
    %598 = vdwg.mxu0
    %v600 = vsel %vm396, %v451, 0
    %602 = vmatprep.subr.mxu0 0.0
    %603 = vmatpush1.msra.mxu0 0.0
    %604 = vmatprep.subr.mxu0 0.0
    %605 = vmatpush1.msra.mxu0 0.0
    %606 = vmatprep.subr.mxu0 0.0
    %607 = vmatpush1.msra.mxu0 0.0
    %608 = vmatprep.subr.mxu0 0.0
    %609 = vmatpush1.msra.mxu0 0.0
    %610 = vmatprep.subr.mxu0 0.0
    %611 = vmatpush1.msra.mxu0 0.0
    %612 = vmatprep.subr.mxu0 0.0
    %613 = vmatpush1.msra.mxu0 0.0
    %614 = vmatprep.subr.mxu0 0.0
    %615 = vmatpush1.msra.mxu0 0.0
    %616 = vmatprep.subr.mxu0 0.0
    %617 = vmatpush1.msra.mxu0 0.0
    %618 = vmatprep.subr.mxu0 0.0
    %619 = vmatpush1.msra.mxu0 0.0
    %620 = vmatprep.subr.mxu0 0.0
    %621 = vmatpush1.msra.mxu0 0.0
    %622 = vmatprep.subr.mxu0 0.0
    %623 = vmatpush1.msra.mxu0 0.0
    %624 = vmatprep.subr.mxu0 0.0
    %625 = vmatpush1.msra.mxu0 0.0
    %626 = vmatprep.subr.mxu0 0.0
    %627 = vmatpush1.msra.mxu0 0.0
    %628 = vmatprep.subr.mxu0 0.0
    %629 = vmatpush1.msra.mxu0 0.0
    %630 = vmatprep.subr.mxu0 0.0
    %631 = vmatpush1.msra.mxu0 0.0
    %632 = vmatprep.subr.mxu0 0.0
    %633 = vmatpush1.msra.mxu0 %v84
    %634 = vmatprep.subr.mxu0 0.0
    %635 = vmatpush2.msra.mxu0 0.0
    %636 = vmatprep.subr.mxu0 0.0
    %637 = vmatpush2.msra.mxu0 0.0
    %638 = vmatprep.subr.mxu0 0.0
    %639 = vmatpush2.msra.mxu0 0.0
    %640 = vmatprep.subr.mxu0 0.0
    %641 = vmatpush2.msra.mxu0 0.0
    %642 = vmatprep.subr.mxu0 0.0
    %643 = vmatpush2.msra.mxu0 0.0
    %644 = vmatprep.subr.mxu0 0.0
    %645 = vmatpush2.msra.mxu0 0.0
    %646 = vmatprep.subr.mxu0 0.0
    %647 = vmatpush2.msra.mxu0 0.0
    %648 = vmatprep.subr.mxu0 0.0
    %649 = vmatpush2.msra.mxu0 0.0
    %650 = vmatprep.subr.mxu0 0.0
    %651 = vmatpush2.msra.mxu0 0.0
    %652 = vmatprep.subr.mxu0 0.0
    %653 = vmatpush2.msra.mxu0 0.0
    %654 = vmatprep.subr.mxu0 0.0
    %655 = vmatpush2.msra.mxu0 0.0
    %656 = vmatprep.subr.mxu0 0.0
    %657 = vmatpush2.msra.mxu0 0.0
    %658 = vmatprep.subr.mxu0 0.0
    %659 = vmatpush2.msra.mxu0 0.0
    %660 = vmatprep.subr.mxu0 0.0
    %661 = vmatpush2.msra.mxu0 0.0
    %662 = vmatprep.subr.mxu0 0.0
    %663 = vmatpush2.msra.mxu0 0.0
    %664 = vmatprep.subr.mxu0 0.0
    %665 = vmatpush2.msra.mxu0 0.0
    %666 = vmatprep.mubr.f32.mxu0 0.0
    %667 = vmatmul.mubr.f32.gmra.mxu0 %v600
    %v668 = vpop.f32.mrf.mxu0
    %v669 = vadd.f32 0.0, %v668
    %v670 = vpop.f32.mrf.mxu0
    %671 = vdwg.mxu0
    %v673 = vsel %vm396, %v452, 0
    %675 = vmatprep.subr.mxu0 0.0
    %676 = vmatpush1.msra.mxu0 0.0
    %677 = vmatprep.subr.mxu0 0.0
    %678 = vmatpush1.msra.mxu0 0.0
    %679 = vmatprep.subr.mxu0 0.0
    %680 = vmatpush1.msra.mxu0 0.0
    %681 = vmatprep.subr.mxu0 0.0
    %682 = vmatpush1.msra.mxu0 0.0
    %683 = vmatprep.subr.mxu0 0.0
    %684 = vmatpush1.msra.mxu0 0.0
    %685 = vmatprep.subr.mxu0 0.0
    %686 = vmatpush1.msra.mxu0 0.0
    %687 = vmatprep.subr.mxu0 0.0
    %688 = vmatpush1.msra.mxu0 0.0
    %689 = vmatprep.subr.mxu0 0.0
    %690 = vmatpush1.msra.mxu0 0.0
    %691 = vmatprep.subr.mxu0 0.0
    %692 = vmatpush1.msra.mxu0 0.0
    %693 = vmatprep.subr.mxu0 0.0
    %694 = vmatpush1.msra.mxu0 0.0
    %695 = vmatprep.subr.mxu0 0.0
    %696 = vmatpush1.msra.mxu0 0.0
    %697 = vmatprep.subr.mxu0 0.0
    %698 = vmatpush1.msra.mxu0 0.0
    %699 = vmatprep.subr.mxu0 0.0
    %700 = vmatpush1.msra.mxu0 0.0
    %701 = vmatprep.subr.mxu0 0.0
    %702 = vmatpush1.msra.mxu0 0.0
    %703 = vmatprep.subr.mxu0 0.0
    %704 = vmatpush1.msra.mxu0 0.0
    %705 = vmatprep.subr.mxu0 0.0
    %706 = vmatpush1.msra.mxu0 %v85
    %707 = vmatprep.subr.mxu0 0.0
    %708 = vmatpush2.msra.mxu0 0.0
    %709 = vmatprep.subr.mxu0 0.0
    %710 = vmatpush2.msra.mxu0 0.0
    %711 = vmatprep.subr.mxu0 0.0
    %712 = vmatpush2.msra.mxu0 0.0
    %713 = vmatprep.subr.mxu0 0.0
    %714 = vmatpush2.msra.mxu0 0.0
    %715 = vmatprep.subr.mxu0 0.0
    %716 = vmatpush2.msra.mxu0 0.0
    %717 = vmatprep.subr.mxu0 0.0
    %718 = vmatpush2.msra.mxu0 0.0
    %719 = vmatprep.subr.mxu0 0.0
    %720 = vmatpush2.msra.mxu0 0.0
    %721 = vmatprep.subr.mxu0 0.0
    %722 = vmatpush2.msra.mxu0 0.0
    %723 = vmatprep.subr.mxu0 0.0
    %724 = vmatpush2.msra.mxu0 0.0
    %725 = vmatprep.subr.mxu0 0.0
    %726 = vmatpush2.msra.mxu0 0.0
    %727 = vmatprep.subr.mxu0 0.0
    %728 = vmatpush2.msra.mxu0 0.0
    %729 = vmatprep.subr.mxu0 0.0
    %730 = vmatpush2.msra.mxu0 0.0
    %731 = vmatprep.subr.mxu0 0.0
    %732 = vmatpush2.msra.mxu0 0.0
    %733 = vmatprep.subr.mxu0 0.0
    %734 = vmatpush2.msra.mxu0 0.0
    %735 = vmatprep.subr.mxu0 0.0
    %736 = vmatpush2.msra.mxu0 0.0
    %737 = vmatprep.subr.mxu0 0.0
    %738 = vmatpush2.msra.mxu0 0.0
    %739 = vmatprep.mubr.f32.mxu0 0.0
    %740 = vmatmul.mubr.f32.gmra.mxu0 %v673
    %v741 = vpop.f32.mrf.mxu0
    %v742 = vadd.f32 0.0, %v741
    %v743 = vpop.f32.mrf.mxu0
    %744 = vdwg.mxu0
    %745 = vst.msk [vmem:[#allocation10] sm:$0xff] %vm91, %v523
    %746 = vst.msk [vmem:[#allocation10 + $0x8] sm:$0xff] %vm91, %v596
    %747 = vst.msk [vmem:[#allocation10 + $0x10] sm:$0xff] %vm91, %v669
    %748 = vst.msk [vmem:[#allocation10 + $0x18] sm:$0xff] %vm91, %v742
    // Predicated region
    $region34: #{tpu_custom_call.1} parent=1 // pred_check
      _
    $region35: #{tpu_custom_call.1} parent=1 // pred_check_branch
      %750 = sbr.rel (0) target = $region37
    $region36: #{tpu_custom_call.1} parent=1 // pred_region
      %s752 = ssub.s32 512, 512
      %753 = vsyncadd [#allocation4], %s752
      %s754 = sshll.u32 [#allocation10], 4
      %s755 = int_to_ptr.vmem [resolvable:$true] %s754
      %760 = dma.vmem_to_hbm [thread:$0]  %s755, 512, %s4, [#allocation4], 128, 128, 8
    $region37: #{tpu_custom_call.1} parent=1 // pred_fallthru
      _
    // Predicated region
    $region38: #{tpu_custom_call.1} parent=1 // pred_check
      _
    $region39: #{tpu_custom_call.1} parent=1 // pred_check_branch
      %762 = sbr.rel (0) target = $region41
    $region40: #{tpu_custom_call.1} parent=1 // pred_region
      %s764 = ssub.s32 512, 512
      %765 = vsyncadd [#allocation12], %s764
      %s766 = sshll.u32 [#allocation11], 4
      %s767 = int_to_ptr.vmem [resolvable:$true] %s766
      %772 = dma.vmem_to_hbm [thread:$0]  %s767, 512, %s5, [#allocation12], 128, 128, 8
    $region41: #{tpu_custom_call.1} parent=1 // pred_fallthru
      _
    // Predicated region
    $region42: #{tpu_custom_call.1} parent=1 // pred_check
      _
    $region43: #{tpu_custom_call.1} parent=1 // pred_check_branch
      %774 = sbr.rel (0) target = $region45
    $region44: #{tpu_custom_call.1} parent=1 // pred_region
      %775 = dma.done [#allocation4], 512
    $region45: #{tpu_custom_call.1} parent=1 // pred_fallthru
      _
    // Predicated region
    $region46: #{tpu_custom_call.1} parent=1 // pred_check
      _
    $region47: #{tpu_custom_call.1} parent=1 // pred_check_branch
      %777 = sbr.rel (0) target = $region49
    $region48: #{tpu_custom_call.1} parent=1 // pred_region
      %778 = dma.done [#allocation12], 512
    $region49: #{tpu_custom_call.1} parent=1 // pred_fallthru
      _
    %779 = vsyncpa [#allocation3], 1
    %780 = vsyncpa [#allocation6], 1
    %781 = vsyncpa [#allocation9], 1
    %782 = vsyncpa [#allocation4], 1
    %783 = vsyncpa [#allocation12], 1

</llo_original>
